<compile_context>
chip_gen: v7x
topology: tpu7x:2x2x1
jax: 0.10.0
libtpu: 0.0.40
codegen_flags: <defaults>
</compile_context>

<pallas_src>
import functools

import jax
import jax.numpy as jnp
from jax.experimental import pallas as pl
from jax.experimental.pallas import tpu as pltpu


def _copy_kernel(x_ref, o_ref):
    # x_ref: (1, 1, tp, HW) input tile from group r of batch b.
    # o_ref: (1, tp, HW)    output tile at out3[b, p_tile, r*HW:(r+1)*HW].
    # The permutation lives entirely in the BlockSpecs; body is a pure copy.
    o_ref[...] = x_ref[0]


def _shuffle_in_block_kernel(x_ref, o_ref, *, groups: int):
    # Fallback (H*W not a multiple of 128): whole (C, HW) slab per batch
    # element, shuffle vectorized in-kernel (no per-channel unrolled loop).
    _, C, HW = x_ref.shape
    cpg = C // groups
    x = x_ref[0]                              # (C, HW)
    y = x.reshape(groups, cpg, HW)
    y = jnp.swapaxes(y, 0, 1)                 # (cpg, groups, HW)
    o_ref[0] = y.reshape(C, HW)


def _choose_channel_tile(cpg: int, hw: int, itemsize: int, align: int,
                         target_bytes: int = 2 << 20) -> int:
    """Largest channel tile tp dividing cpg with a (tp, hw) slab <= ~2 MB.

    tp is kept a multiple of the sublane pack factor (8 rows f32 / 16 bf16 /
    32 int8) unless it equals cpg, so blocks stay (8,128)-tile aligned.
    """
    if cpg * hw * itemsize <= target_bytes:
        return cpg
    cands = [d for d in range(align, cpg, align) if cpg % d == 0]
    fitting = [d for d in cands if d * hw * itemsize <= target_bytes]
    if fitting:
        return max(fitting)
    if cands:
        return min(cands)
    return cpg  # no aligned divisor of cpg; use the whole group


def channel_shuffle(x: jax.Array, groups: int) -> jax.Array:
    B, C, H, W = x.shape
    assert C % groups == 0, "channels must be divisible by groups"
    if groups == 1:
        return x  # identity permutation

    cpg = C // groups
    HW = H * W
    itemsize = jnp.dtype(x.dtype).itemsize
    # Sublane pack factor: 8 rows/vreg for 32-bit, 16 for bf16, 32 for int8.
    align = 8 * max(1, 4 // itemsize)

    if HW % 128 == 0:
        # Main path: permutation expressed purely via BlockSpec index_maps.
        tp = _choose_channel_tile(cpg, HW, itemsize, align)
        x4 = x.reshape(B, groups, cpg, HW)          # free, contiguity-preserving
        out3 = pl.pallas_call(
            _copy_kernel,
            out_shape=jax.ShapeDtypeStruct((B, cpg, groups * HW), x.dtype),
            grid=(B, groups, cpg // tp),
            in_specs=[
                pl.BlockSpec((1, 1, tp, HW), lambda b, r, p: (b, r, p, 0)),
            ],
            out_specs=pl.BlockSpec((1, tp, HW), lambda b, r, p: (b, p, r)),
            compiler_params=pltpu.CompilerParams(
                dimension_semantics=("parallel", "parallel", "parallel")
            ),
        )(x4)
        # (B, cpg, g*HW) -> (B, C, H, W) is a free reshape: channel = p*g + r.
        return out3.reshape(B, C, H, W)

    # Fallback: lane axis H*W is not 128-aligned for a sub-full block, so keep
    # full (C, HW) blocks per batch element and shuffle inside the kernel.
    kernel = functools.partial(_shuffle_in_block_kernel, groups=groups)
    x3 = x.reshape(B, C, HW)
    out3 = pl.pallas_call(
        kernel,
        out_shape=jax.ShapeDtypeStruct((B, C, HW), x.dtype),
        grid=(B,),
        in_specs=[pl.BlockSpec((1, C, HW), lambda b: (b, 0, 0))],
        out_specs=pl.BlockSpec((1, C, HW), lambda b: (b, 0, 0)),
        compiler_params=pltpu.CompilerParams(dimension_semantics=("parallel",)),
    )(x3)
    return out3.reshape(B, C, H, W)


def channel_shuffle_ref(x: jax.Array, groups: int) -> jax.Array:
    # Pure-JAX reference mirroring the PyTorch view/transpose/reshape.
    B, C, H, W = x.shape
    cpg = C // groups
    y = x.reshape(B, groups, cpg, H, W)
    y = jnp.transpose(y, (0, 2, 1, 3, 4))
    return y.reshape(B, C, H, W)


if __name__ == "__main__":
    key = jax.random.PRNGKey(0)

    # Primary test: matches the module's expected small shape.
    B, C, H, W = 2, 4, 16, 16
    groups = 2
    x = jax.random.normal(key, (B, C, H, W), dtype=jnp.float32)

    out = jax.block_until_ready(channel_shuffle(x, groups))
    ref = channel_shuffle_ref(x, groups)
    assert out.shape == (B, C, H, W)
    assert out.dtype == x.dtype
    assert jnp.array_equal(out, ref), "Pallas output mismatch vs reference"

    # Secondary check: more channels / groups through the same tiled path.
    B2, C2, H2, W2, g2 = 2, 32, 16, 16, 4
    x2 = jax.random.normal(jax.random.PRNGKey(0), (B2, C2, H2, W2),
                           dtype=jnp.float32)
    out2 = jax.block_until_ready(channel_shuffle(x2, g2))
    assert jnp.array_equal(out2, channel_shuffle_ref(x2, g2)), \
        "Pallas output mismatch vs reference (second config)"

    print("KERNEL_OK")
</pallas_src>

<mosaic_0001>
module attributes {stable_mosaic.version = 11 : i64} {
  func.func @_copy_kernel(%arg0: i32, %arg1: i32, %arg2: i32, %arg3: memref<1x1x2x256xf32, #tpu.memory_space<vmem>>, %arg4: memref<1x2x256xf32, #tpu.memory_space<vmem>>) attributes {dimension_semantics = [#tpu.dimension_semantics<parallel>, #tpu.dimension_semantics<parallel>, #tpu.dimension_semantics<parallel>], iteration_bounds = array<i64: 2, 2, 1>, scalar_prefetch = 0 : i64, scratch_operands = 0 : i64, tpu.core_type = #tpu.core_type<tc>, window_params = [{transform_indices = @transform_0, window_bounds = array<i64: 1, 1, 2, 256>}, {transform_indices = @transform_1, window_bounds = array<i64: 1, 2, 256>}]} {
    %c0 = arith.constant 0 : index
    %c0_0 = arith.constant 0 : index
    %c0_1 = arith.constant 0 : index
    %c0_2 = arith.constant 0 : index
    %0 = vector.load %arg3[%c0, %c0_0, %c0_1, %c0_2] : memref<1x1x2x256xf32, #tpu.memory_space<vmem>>, vector<1x1x2x256xf32>
    %1 = vector.shape_cast %0 : vector<1x1x2x256xf32> to vector<1x2x256xf32>
    %c0_3 = arith.constant 0 : index
    %c0_4 = arith.constant 0 : index
    %c0_5 = arith.constant 0 : index
    %2 = vector.load %arg4[%c0_3, %c0_4, %c0_5] : memref<1x2x256xf32, #tpu.memory_space<vmem>>, vector<1x2x256xf32>
    tpu.vector_store %arg4[%c0_3, %c0_4, %c0_5], %1 {strides = array<i32>} : memref<1x2x256xf32, #tpu.memory_space<vmem>>, vector<1x2x256xf32>,
    return
  }
  func.func @transform_0(%arg0: i32, %arg1: i32, %arg2: i32) -> (i32, i32, i32, i32) {
    %c0_i32 = arith.constant 0 : i32
    %c0_i32_0 = arith.constant 0 : i32
    return %arg0, %arg1, %arg2, %c0_i32 : i32, i32, i32, i32
  }
  func.func @transform_1(%arg0: i32, %arg1: i32, %arg2: i32) -> (i32, i32, i32) {
    %c0_i32 = arith.constant 0 : i32
    return %arg0, %arg2, %arg1 : i32, i32, i32
  }
}

</mosaic_0001>

<llo_original>
// kernel: tpu_custom_call.1
$region0: #{tpu_custom_call.1}
  #allocation0 [shape = 'u32[]', space=smem, size = 0x4, offset = 0x4, fixed_abs, tag = 'smem constant byte address 0x4 - core index']
  #allocation1 [shape = 'u32[144,128]{1,0:T(1,128)}', space=vmem, size = 0x12000, scoped, tag = 'internal scratch']
  %s0 = inlined_call_operand.hbm [shape: f32[2,2,2,256], index: 0, kind: input, shape index: {}]
  %s1 = inlined_call_operand.hbm [shape: f32[2,2,512], index: 1, kind: output, shape index: {}]
  %s2 = sld [smem:[#allocation0]]
  $region41: #{tpu_custom_call.1} parent=0
    _
  %s4 = ssub.s32 1, %s2
  %s5 = scalar_select 0, %s4, %s2
  $region1: #{tpu_custom_call.1} parent=0
    #allocation2 [shape = 'u8[4096]{0}', space=vmem, size = 0x1000, scoped, tag = 'input window, operand 0']
    #allocation3 [shape = 's32[2]{0}', space=sflag, size = 0x8, scoped, tag = 'scoped memory for tpu_custom_call.1']
    #allocation4 [shape = 's32[2]{0}', space=sflag, size = 0x8, scoped, tag = 'scoped memory for tpu_custom_call.1']
    #allocation5 [shape = 'u8[4096]{0}', space=vmem, size = 0x1000, scoped, tag = 'output window, operand 0']
    %6 = vsyncpa [#allocation3], 0
    %s7 = scalar_lea.sflag [#allocation3], 1
    %8 = vsyncpa %s7, 0
    %9 = vsyncpa [#allocation4], 0
    %s10 = scalar_lea.sflag [#allocation4], 1
    %11 = vsyncpa %s10, 0
    loop: start=0, step=1, limit=6
    $region2: #{tpu_custom_call.1} parent=1 // loop_pre_header
      _
    $region3: #{tpu_custom_call.1} parent=1 // loop_header
      %s13 = sphi 0, %s17
      %p14 = scmp.ge.s32.totalorder %s13, 6
      %s20 = sphi 0, %s39
      %s21 = sphi 0, %s35
      %s22 = sphi 0, %s31
      %s23 = sphi 0, %s20
      %s24 = sphi 0, %s21
      %s25 = sphi 0, %s22
      %s26 = sphi 0, %s23
      %s27 = sphi 0, %s24
      %s28 = sphi 0, %s25
      %s46 = sphi 0, %s48
      %s49 = sphi 0, %s46
      %s50 = sphi 0, %s49
      %s66 = sphi 0, %s50
      %s76 = sphi 0, %s78
      %s79 = sphi 0, %s76
      %s80 = sphi 0, %s79
      %s96 = sphi 0, %s80
    $region4: #{tpu_custom_call.1} parent=1 // loop_header_branch
      %16 = sbr.rel (%p14) target = $region8
    $region5: #{tpu_custom_call.1} parent=1 // loop_body
      %s18 = ssub.s32 %s13, 1
      %s19 = ssub.s32 %s13, 2
      %s29 = sadd.s32 1, %s22
      %p30 = scmp.ge.s32.totalorder %s29, 1
      %s31 = scalar_select %p30, 0, %s29
      %s32 = sadd.s32 1, %s21
      %s33 = scalar_select %p30, %s32, %s21
      %p34 = scmp.ge.s32.totalorder %s33, 2
      %s35 = scalar_select %p34, 0, %s33
      %s36 = sadd.s32 1, %s20
      %s37 = scalar_select %p34, %s36, %s20
      %p38 = scmp.ge.s32.totalorder %s37, 2
      %s39 = scalar_select %p38, 0, %s37
      %s40 = ssub.s32 %s20, %s39
      %s41 = ssub.s32 %s21, %s35
      %s42 = sor.u32 %s40, %s41
      %s43 = ssub.s32 %s22, %s31
      %s44 = sor.u32 %s42, %s43
      %p45 = scmp.eq.s32.totalorder %s44, 0
      %s47 = sadd.s32 %s46, 1
      %s48 = scalar_select %p45, %s46, %s47
      %p51 = pneg %p45
      %p52 = scmp.eq.s32.totalorder %s13, 3
      %p53 = por %p51, %p52
      %p54 = scmp.ne.s32.totalorder %s46, %s49
      %p55 = scmp.eq.s32.totalorder %s13, 0
      %p56 = por %p54, %p55
      %p57 = scmp.ne.s32.totalorder %s46, %s49
      %p58 = scmp.eq.s32.totalorder %s18, 3
      %p59 = por %p57, %p58
      %p60 = scmp.ne.s32.totalorder %s49, %s50
      %p61 = scmp.eq.s32.totalorder %s18, 0
      %p62 = por %p60, %p61
      %p63 = scmp.ne.s32.totalorder %s49, %s50
      %p64 = scmp.eq.s32.totalorder %s19, 3
      %p65 = por %p63, %p64
      %p67 = scmp.ne.s32.totalorder %s50, %s66
      %p68 = scmp.eq.s32.totalorder %s19, 0
      %p69 = por %p67, %p68
      %s70 = ssub.s32 %s20, %s39
      %s71 = ssub.s32 %s22, %s31
      %s72 = sor.u32 %s70, %s71
      %s73 = ssub.s32 %s21, %s35
      %s74 = sor.u32 %s72, %s73
      %p75 = scmp.eq.s32.totalorder %s74, 0
      %s77 = sadd.s32 %s76, 1
      %s78 = scalar_select %p75, %s76, %s77
      %p81 = pneg %p75
      %p82 = scmp.eq.s32.totalorder %s13, 3
      %p83 = por %p81, %p82
      %p84 = scmp.ne.s32.totalorder %s76, %s79
      %p85 = scmp.eq.s32.totalorder %s13, 0
      %p86 = por %p84, %p85
      %p87 = scmp.ne.s32.totalorder %s76, %s79
      %p88 = scmp.eq.s32.totalorder %s18, 3
      %p89 = por %p87, %p88
      %p90 = scmp.ne.s32.totalorder %s79, %s80
      %p91 = scmp.eq.s32.totalorder %s18, 0
      %p92 = por %p90, %p91
      %p93 = scmp.ne.s32.totalorder %s79, %s80
      %p94 = scmp.eq.s32.totalorder %s19, 3
      %p95 = por %p93, %p94
      %p97 = scmp.ne.s32.totalorder %s80, %s96
      %p98 = scmp.eq.s32.totalorder %s19, 0
      %p99 = por %p97, %p98
      %p100 = scmp.le.s32.totalorder 1, %s13
      %p101 = scmp.lt.s32.totalorder %s13, 5
      %p102 = pnand %p100, %p101
      %p103 = pneg %p102
      // Predicated region
      $region9: #{tpu_custom_call.1} parent=5 // pred_check
        _
      $region10: #{tpu_custom_call.1} parent=5 // pred_check_branch
        %105 = sbr.rel (%p102) target = $region12
      $region11: #{tpu_custom_call.1} parent=5 // pred_region
        %s106 = ssub.s32 %s13, 1
      $region12: #{tpu_custom_call.1} parent=5 // pred_fallthru
        _
      %p107 = scmp.lt.s32.totalorder %s13, 4
      // Predicated region
      $region13: #{tpu_custom_call.1} parent=5 // pred_check
        %p108 = pneg %p107
      $region14: #{tpu_custom_call.1} parent=5 // pred_check_branch
        %110 = sbr.rel (%p108) target = $region16
      $region15: #{tpu_custom_call.1} parent=5 // pred_region
        // Predicated region
        $region17: #{tpu_custom_call.1} parent=15 // pred_check
          %p111 = pneg %p56
        $region18: #{tpu_custom_call.1} parent=15 // pred_check_branch
          %113 = sbr.rel (%p111) target = $region20
        $region19: #{tpu_custom_call.1} parent=15 // pred_region
          %s114 = sand.u32 %s46, 1
          %s115 = scalar_lea.sflag [#allocation3], %s114
          %s116 = sand.u32 %s46, 1
          %s117 = smul.addr %s116, 4
          %s118 = scalar_lea.vmem [#allocation2], %s117
          %s120 = ssub.s32 64, 64
          %121 = vsyncadd %s115, %s120
          %s122 = smul.addr %s22, 2
          %s123 = smul.addr %s21, 2
          %s124 = sadd.s32 %s122, %s123
          %s125 = smul.addr %s20, 4
          %s126 = sadd.s32 %s124, %s125
          %s127 = smul.addr %s126, 32
          %s128 = scalar_lea.hbm %s0, %s127
          %s130 = sshll.u32 %s118, 4
          %s131 = int_to_ptr.vmem [resolvable:$true] %s130
          %133 = dma.hbm_to_vmem [thread:$0]  %s128, 64, %s131, %s115
        $region20: #{tpu_custom_call.1} parent=15 // pred_fallthru
          _
      $region16: #{tpu_custom_call.1} parent=5 // pred_fallthru
        _
      %p134 = scmp.le.s32.totalorder 1, %s13
      %p135 = scmp.lt.s32.totalorder %s13, 5
      %p136 = pnand %p134, %p135
      %p137 = pneg %p136
      // Predicated region
      $region21: #{tpu_custom_call.1} parent=5 // pred_check
        _
      $region22: #{tpu_custom_call.1} parent=5 // pred_check_branch
        %139 = sbr.rel (%p136) target = $region24
      $region23: #{tpu_custom_call.1} parent=5 // pred_region
        %s140 = ssub.s32 %s13, 1
        %s141 = sand.u32 %s49, 1
        %s142 = scalar_lea.sflag [#allocation3], %s141
        %s143 = sand.u32 %s49, 1
        %s144 = smul.addr %s143, 4
        %s145 = scalar_lea.vmem [#allocation2], %s144
        // Predicated region
        $region25: #{tpu_custom_call.1} parent=23 // pred_check
          %p146 = pneg %p62
        $region26: #{tpu_custom_call.1} parent=23 // pred_check_branch
          %148 = sbr.rel (%p146) target = $region28
        $region27: #{tpu_custom_call.1} parent=23 // pred_region
          %149 = dma.done %s142, 64
        $region28: #{tpu_custom_call.1} parent=23 // pred_fallthru
          _
        %s150 = sand.u32 %s49, 1
        %s151 = scalar_lea.sflag [#allocation3], %s150
        %s152 = sand.u32 %s49, 1
        %s153 = smul.addr %s152, 4
        %s154 = scalar_lea.vmem [#allocation2], %s153
        %p155 = pneg %p62
        %p156 = pneg %p59
        %p157 = pneg %p92
        %p158 = pneg %p89
        %s159 = sand.u32 %s79, 1
        %s160 = scalar_lea.sflag [#allocation4], %s159
        %s161 = sand.u32 %s79, 1
        %s162 = smul.addr %s161, 4
        %s163 = scalar_lea.vmem [#allocation5], %s162
        %s164 = smul.u32 2, %s24
        %v165 = vld [vmem:[%s145] sm:$0xf]
        %166 = vst [vmem:[%s163] sm:$0xf] %v165
        %s167 = sand.u32 %s79, 1
        %s168 = scalar_lea.sflag [#allocation4], %s167
        %s169 = sand.u32 %s79, 1
        %s170 = smul.addr %s169, 4
        %s171 = scalar_lea.vmem [#allocation5], %s170
        // Predicated region
        $region29: #{tpu_custom_call.1} parent=23 // pred_check
          %p172 = pneg %p89
        $region30: #{tpu_custom_call.1} parent=23 // pred_check_branch
          %174 = sbr.rel (%p172) target = $region32
        $region31: #{tpu_custom_call.1} parent=23 // pred_region
          %s175 = smul.u32 2, %s24
          %s177 = ssub.s32 64, 64
          %178 = vsyncadd %s168, %s177
          %s179 = smul.addr %s25, 4
          %s180 = sadd.s32 %s175, %s179
          %s181 = smul.addr %s23, 4
          %s182 = sadd.s32 %s180, %s181
          %s183 = smul.addr %s182, 32
          %s184 = scalar_lea.hbm %s1, %s183
          %s186 = sshll.u32 %s171, 4
          %s187 = int_to_ptr.vmem [resolvable:$true] %s186
          %189 = dma.vmem_to_hbm [thread:$0]  %s187, 64, %s184, %s168
        $region32: #{tpu_custom_call.1} parent=23 // pred_fallthru
          _
      $region24: #{tpu_custom_call.1} parent=5 // pred_fallthru
        _
      %p190 = scmp.le.s32.totalorder 2, %s13
      // Predicated region
      $region33: #{tpu_custom_call.1} parent=5 // pred_check
        %p191 = pneg %p190
      $region34: #{tpu_custom_call.1} parent=5 // pred_check_branch
        %193 = sbr.rel (%p191) target = $region36
      $region35: #{tpu_custom_call.1} parent=5 // pred_region
        %s194 = ssub.s32 %s13, 2
        // Predicated region
        $region37: #{tpu_custom_call.1} parent=35 // pred_check
          %p195 = pneg %p95
        $region38: #{tpu_custom_call.1} parent=35 // pred_check_branch
          %197 = sbr.rel (%p195) target = $region40
        $region39: #{tpu_custom_call.1} parent=35 // pred_region
          %s198 = sand.u32 %s80, 1
          %s199 = scalar_lea.sflag [#allocation4], %s198
          %s200 = sand.u32 %s80, 1
          %s201 = smul.addr %s200, 4
          %s202 = scalar_lea.vmem [#allocation5], %s201
          %203 = dma.done %s199, 64
        $region40: #{tpu_custom_call.1} parent=35 // pred_fallthru
          _
      $region36: #{tpu_custom_call.1} parent=5 // pred_fallthru
        _
    $region6: #{tpu_custom_call.1} parent=1 // loop_footer
      %s17 = sadd.s32 1, %s13
    $region7: #{tpu_custom_call.1} parent=1 // loop_footer_branch
      %12 = sbr.rel target = $region3
    $region8: #{tpu_custom_call.1} parent=1 // loop_exit
      _
    %204 = vsyncpa [#allocation3], 1
    %s205 = scalar_lea.sflag [#allocation3], 1
    %206 = vsyncpa %s205, 1
    %207 = vsyncpa [#allocation4], 1
    %s208 = scalar_lea.sflag [#allocation4], 1
    %209 = vsyncpa %s208, 1

</llo_original>
